<compile_context>
chip_gen: v7x
topology: tpu7x:2x2x1
jax: 0.10.0
libtpu: 0.0.40
codegen_flags: <defaults>
</compile_context>

<pallas_src>
import jax
import jax.numpy as jnp
from jax.experimental import pallas as pl
from jax.experimental.pallas import tpu as pltpu

_POOL = 7     # nn.AvgPool2d(7, stride=1)
_STRIDE = 1


def _add_relu_avgpool_kernel(a_ref, b_ref, o_ref):
    """Fused (a + b) -> ReLU -> 7x7 stride-1 average pool on one VMEM tile.

    a_ref, b_ref : (block_nc, H, W)   input tiles
    o_ref        : (block_nc, Ho, Wo) pooled output tile, Ho = H-6, Wo = W-6
    """
    ho = o_ref.shape[1]
    wo = o_ref.shape[2]

    # Elementwise add + ReLU in f32 (pure VPU work, hidden under input DMAs).
    y = jnp.maximum(
        a_ref[...].astype(jnp.float32) + b_ref[...].astype(jnp.float32), 0.0
    )

    # Separable 7x7 box filter (VALID, stride 1): 6 + 6 shifted adds instead
    # of 49.  All slice offsets are static.
    tmp = y[:, :, 0:wo]
    for dw in range(1, _POOL):
        tmp = tmp + y[:, :, dw:dw + wo]
    acc = tmp[:, 0:ho, :]
    for dh in range(1, _POOL):
        acc = acc + tmp[:, dh:dh + ho, :]

    o_ref[...] = (acc * (1.0 / float(_POOL * _POOL))).astype(o_ref.dtype)


def add_relu_avgpool(a, b, *, target_tile_bytes=2 << 20):
    """BasicAddReluAvgPool.forward([a, b]) for NCHW inputs of equal shape."""
    assert a.shape == b.shape, "expects two same-shape NCHW tensors"
    assert a.dtype == b.dtype
    n, c, h, w = a.shape
    assert h >= _POOL and w >= _POOL, "spatial dims must be >= pool size (7)"
    ho = (h - _POOL) // _STRIDE + 1
    wo = (w - _POOL) // _STRIDE + 1

    nc = n * c
    # Merging the leading (N, C) dims is a metadata-only reshape (no HBM copy).
    a3 = a.reshape(nc, h, w)
    b3 = b.reshape(nc, h, w)

    # Tile only over the fused N*C axis; keep full H x W per block (no halo).
    itemsize = jnp.dtype(a.dtype).itemsize
    per_slice = h * w * itemsize
    block_nc = max(1, min(nc, target_tile_bytes // per_slice))
    # On large inputs make sure there are >= 2 grid steps so both v7x
    # TensorCores (and the software pipeline) get work.
    if block_nc >= nc and nc > 1 and nc * per_slice > (4 << 20):
        block_nc = (nc + 1) // 2
    grid = (pl.cdiv(nc, block_nc),)   # ragged tail handled by masked block

    out3 = pl.pallas_call(
        _add_relu_avgpool_kernel,
        out_shape=jax.ShapeDtypeStruct((nc, ho, wo), a.dtype),
        grid_spec=pltpu.PrefetchScalarGridSpec(
            num_scalar_prefetch=0,
            grid=grid,
            in_specs=[
                pl.BlockSpec((block_nc, h, w), lambda i: (i, 0, 0)),
                pl.BlockSpec((block_nc, h, w), lambda i: (i, 0, 0)),
            ],
            out_specs=pl.BlockSpec((block_nc, ho, wo), lambda i: (i, 0, 0)),
        ),
        compiler_params=pltpu.CompilerParams(
            dimension_semantics=("parallel",),
            # Big enough for ~2 MiB/operand double-buffered tiles on v5e
            # (16 MiB default scoped limit), yet below v7x's 64 MiB physical.
            vmem_limit_bytes=48 << 20,
        ),
    )(a3, b3)

    return out3.reshape(n, c, ho, wo)


def basic_add_relu_avgpool(x):
    """Mirror of BasicAddReluAvgPool.forward: x is a list of two NCHW tensors."""
    assert isinstance(x, (list, tuple)) and len(x) == 2
    return add_relu_avgpool(x[0], x[1])


if __name__ == "__main__":
    key = jax.random.PRNGKey(0)
    k0, k1 = jax.random.split(key)
    # NCHW, small shapes: batch=2, channels=4, spatial=16x16  ->  output 10x10
    a = jax.random.normal(k0, (2, 4, 16, 16), dtype=jnp.float32)
    b = jax.random.normal(k1, (2, 4, 16, 16), dtype=jnp.float32)

    out = basic_add_relu_avgpool([a, b])
    out = jax.block_until_ready(out)

    # Plain-JAX reference: relu(a+b) followed by 7x7 stride-1 average pooling.
    y = jnp.maximum(a + b, 0.0)
    ref = jax.lax.reduce_window(
        y, 0.0, jax.lax.add,
        window_dimensions=(1, 1, _POOL, _POOL),
        window_strides=(1, 1, 1, 1),
        padding="VALID",
    ) / float(_POOL * _POOL)

    assert out.shape == ref.shape and out.dtype == ref.dtype, (out.shape, ref.shape)
    assert jnp.allclose(out, ref, atol=1e-5, rtol=1e-5), "mismatch vs reference"
    print("KERNEL_OK")
</pallas_src>

<mosaic_0001>
module attributes {stable_mosaic.version = 11 : i64} {
  func.func @_add_relu_avgpool_kernel(%arg0: i32, %arg1: memref<8x16x16xf32, #tpu.memory_space<vmem>>, %arg2: memref<8x16x16xf32, #tpu.memory_space<vmem>>, %arg3: memref<8x10x10xf32, #tpu.memory_space<vmem>>) attributes {dimension_semantics = [#tpu.dimension_semantics<parallel>], iteration_bounds = array<i64: 1>, scalar_prefetch = 0 : i64, scratch_operands = 0 : i64, tpu.core_type = #tpu.core_type<tc>, window_params = [{transform_indices = @transform_0, window_bounds = array<i64: 8, 16, 16>}, {transform_indices = @transform_1, window_bounds = array<i64: 8, 16, 16>}, {transform_indices = @transform_2, window_bounds = array<i64: 8, 10, 10>}]} {
    %c0 = arith.constant 0 : index
    %c0_0 = arith.constant 0 : index
    %c0_1 = arith.constant 0 : index
    %0 = vector.load %arg1[%c0, %c0_0, %c0_1] : memref<8x16x16xf32, #tpu.memory_space<vmem>>, vector<8x16x16xf32>
    %c0_2 = arith.constant 0 : index
    %c0_3 = arith.constant 0 : index
    %c0_4 = arith.constant 0 : index
    %1 = vector.load %arg2[%c0_2, %c0_3, %c0_4] : memref<8x16x16xf32, #tpu.memory_space<vmem>>, vector<8x16x16xf32>
    %2 = arith.addf %0, %1 : vector<8x16x16xf32>
    %cst = arith.constant 0.000000e+00 : f32
    %3 = vector.broadcast %cst : f32 to vector<8x16x16xf32>
    %4 = arith.maximumf %2, %3 : vector<8x16x16xf32>
    %5 = vector.extract_strided_slice %4 {offsets = [0, 0, 0], sizes = [8, 16, 10], strides = [1, 1, 1]} : vector<8x16x16xf32> to vector<8x16x10xf32>
    %6 = vector.extract_strided_slice %4 {offsets = [0, 0, 1], sizes = [8, 16, 10], strides = [1, 1, 1]} : vector<8x16x16xf32> to vector<8x16x10xf32>
    %7 = arith.addf %5, %6 : vector<8x16x10xf32>
    %8 = vector.extract_strided_slice %4 {offsets = [0, 0, 2], sizes = [8, 16, 10], strides = [1, 1, 1]} : vector<8x16x16xf32> to vector<8x16x10xf32>
    %9 = arith.addf %7, %8 : vector<8x16x10xf32>
    %10 = vector.extract_strided_slice %4 {offsets = [0, 0, 3], sizes = [8, 16, 10], strides = [1, 1, 1]} : vector<8x16x16xf32> to vector<8x16x10xf32>
    %11 = arith.addf %9, %10 : vector<8x16x10xf32>
    %12 = vector.extract_strided_slice %4 {offsets = [0, 0, 4], sizes = [8, 16, 10], strides = [1, 1, 1]} : vector<8x16x16xf32> to vector<8x16x10xf32>
    %13 = arith.addf %11, %12 : vector<8x16x10xf32>
    %14 = vector.extract_strided_slice %4 {offsets = [0, 0, 5], sizes = [8, 16, 10], strides = [1, 1, 1]} : vector<8x16x16xf32> to vector<8x16x10xf32>
    %15 = arith.addf %13, %14 : vector<8x16x10xf32>
    %16 = vector.extract_strided_slice %4 {offsets = [0, 0, 6], sizes = [8, 16, 10], strides = [1, 1, 1]} : vector<8x16x16xf32> to vector<8x16x10xf32>
    %17 = arith.addf %15, %16 : vector<8x16x10xf32>
    %18 = vector.extract_strided_slice %17 {offsets = [0, 0, 0], sizes = [8, 10, 10], strides = [1, 1, 1]} : vector<8x16x10xf32> to vector<8x10x10xf32>
    %19 = vector.extract_strided_slice %17 {offsets = [0, 1, 0], sizes = [8, 10, 10], strides = [1, 1, 1]} : vector<8x16x10xf32> to vector<8x10x10xf32>
    %20 = arith.addf %18, %19 : vector<8x10x10xf32>
    %21 = vector.extract_strided_slice %17 {offsets = [0, 2, 0], sizes = [8, 10, 10], strides = [1, 1, 1]} : vector<8x16x10xf32> to vector<8x10x10xf32>
    %22 = arith.addf %20, %21 : vector<8x10x10xf32>
    %23 = vector.extract_strided_slice %17 {offsets = [0, 3, 0], sizes = [8, 10, 10], strides = [1, 1, 1]} : vector<8x16x10xf32> to vector<8x10x10xf32>
    %24 = arith.addf %22, %23 : vector<8x10x10xf32>
    %25 = vector.extract_strided_slice %17 {offsets = [0, 4, 0], sizes = [8, 10, 10], strides = [1, 1, 1]} : vector<8x16x10xf32> to vector<8x10x10xf32>
    %26 = arith.addf %24, %25 : vector<8x10x10xf32>
    %27 = vector.extract_strided_slice %17 {offsets = [0, 5, 0], sizes = [8, 10, 10], strides = [1, 1, 1]} : vector<8x16x10xf32> to vector<8x10x10xf32>
    %28 = arith.addf %26, %27 : vector<8x10x10xf32>
    %29 = vector.extract_strided_slice %17 {offsets = [0, 6, 0], sizes = [8, 10, 10], strides = [1, 1, 1]} : vector<8x16x10xf32> to vector<8x10x10xf32>
    %30 = arith.addf %28, %29 : vector<8x10x10xf32>
    %cst_5 = arith.constant 0.0204081628 : f32
    %31 = vector.broadcast %cst_5 : f32 to vector<8x10x10xf32>
    %32 = arith.mulf %30, %31 : vector<8x10x10xf32>
    %c0_6 = arith.constant 0 : index
    %c0_7 = arith.constant 0 : index
    %c0_8 = arith.constant 0 : index
    %33 = vector.load %arg3[%c0_6, %c0_7, %c0_8] : memref<8x10x10xf32, #tpu.memory_space<vmem>>, vector<8x10x10xf32>
    tpu.vector_store %arg3[%c0_6, %c0_7, %c0_8], %32 {strides = array<i32>} : memref<8x10x10xf32, #tpu.memory_space<vmem>>, vector<8x10x10xf32>,
    return
  }
  func.func @transform_0(%arg0: i32) -> (i32, i32, i32) {
    %c0_i32 = arith.constant 0 : i32
    %c0_i32_0 = arith.constant 0 : i32
    %c0_i32_1 = arith.constant 0 : i32
    return %arg0, %c0_i32, %c0_i32_0 : i32, i32, i32
  }
  func.func @transform_1(%arg0: i32) -> (i32, i32, i32) {
    %c0_i32 = arith.constant 0 : i32
    %c0_i32_0 = arith.constant 0 : i32
    %c0_i32_1 = arith.constant 0 : i32
    return %arg0, %c0_i32, %c0_i32_0 : i32, i32, i32
  }
  func.func @transform_2(%arg0: i32) -> (i32, i32, i32) {
    %c0_i32 = arith.constant 0 : i32
    %c0_i32_0 = arith.constant 0 : i32
    %c0_i32_1 = arith.constant 0 : i32
    return %arg0, %c0_i32, %c0_i32_0 : i32, i32, i32
  }
}

</mosaic_0001>

<llo_original>
// kernel: tpu_custom_call.1
$region0: #{tpu_custom_call.1}
  #allocation0 [shape = 'u32[]', space=smem, size = 0x4, offset = 0x4, fixed_abs, tag = 'smem constant byte address 0x4 - core index']
  #allocation1 [shape = 'u32[144,128]{1,0:T(1,128)}', space=vmem, size = 0x12000, scoped, tag = 'internal scratch']
  %s0 = inlined_call_operand.hbm [shape: f32[8,16,16], index: 0, kind: input, shape index: {}]
  %s1 = inlined_call_operand.hbm [shape: f32[8,16,16], index: 1, kind: input, shape index: {}]
  %s2 = inlined_call_operand.vmem [shape: f32[8,10,10], index: 2, kind: output, shape index: {}]
  %s3 = sld [smem:[#allocation0]]
  $region26: #{tpu_custom_call.1} parent=0
    _
  %s5 = ssub.s32 1, %s3
  %s6 = scalar_select 0, %s5, %s3
  $region1: #{tpu_custom_call.1} parent=0
    #allocation2 [shape = 'u8[65536]{0}', space=vmem, size = 0x10000, scoped, tag = 'input window, operand 0, single buffered']
    #allocation3 [shape = 's32[1]{0}', space=sflag, size = 0x4, scoped, tag = 'scoped memory for tpu_custom_call.1']
    #allocation4 [shape = 'u8[65536]{0}', space=vmem, size = 0x10000, scoped, tag = 'input window, operand 1, single buffered']
    #allocation5 [shape = 's32[1]{0}', space=sflag, size = 0x4, scoped, tag = 'scoped memory for tpu_custom_call.1']
    %7 = vsyncpa [#allocation3], 0
    %8 = vsyncpa [#allocation5], 0
    // Predicated region
    $region2: #{tpu_custom_call.1} parent=1 // pred_check
      _
    $region3: #{tpu_custom_call.1} parent=1 // pred_check_branch
      %10 = sbr.rel (0) target = $region5
    $region4: #{tpu_custom_call.1} parent=1 // pred_region
      %s12 = ssub.s32 2048, 2048
      %13 = vsyncadd [#allocation3], %s12
      %s14 = sshll.u32 [#allocation2], 4
      %s15 = int_to_ptr.vmem [resolvable:$true] %s14
      %20 = dma.hbm_to_vmem [thread:$0]  %s0, 2048, %s15, [#allocation3], 128, 128, 8
    $region5: #{tpu_custom_call.1} parent=1 // pred_fallthru
      _
    // Predicated region
    $region6: #{tpu_custom_call.1} parent=1 // pred_check
      _
    $region7: #{tpu_custom_call.1} parent=1 // pred_check_branch
      %22 = sbr.rel (0) target = $region9
    $region8: #{tpu_custom_call.1} parent=1 // pred_region
      %s24 = ssub.s32 2048, 2048
      %25 = vsyncadd [#allocation5], %s24
      %s26 = sshll.u32 [#allocation4], 4
      %s27 = int_to_ptr.vmem [resolvable:$true] %s26
      %32 = dma.hbm_to_vmem [thread:$0]  %s1, 2048, %s27, [#allocation5], 128, 128, 8
    $region9: #{tpu_custom_call.1} parent=1 // pred_fallthru
      _
    // Predicated region
    $region10: #{tpu_custom_call.1} parent=1 // pred_check
      _
    $region11: #{tpu_custom_call.1} parent=1 // pred_check_branch
      %34 = sbr.rel (0) target = $region13
    $region12: #{tpu_custom_call.1} parent=1 // pred_region
      %35 = dma.done [#allocation3], 2048
    $region13: #{tpu_custom_call.1} parent=1 // pred_fallthru
      _
    // Predicated region
    $region14: #{tpu_custom_call.1} parent=1 // pred_check
      _
    $region15: #{tpu_custom_call.1} parent=1 // pred_check_branch
      %37 = sbr.rel (0) target = $region17
    $region16: #{tpu_custom_call.1} parent=1 // pred_region
      %38 = dma.done [#allocation5], 2048
    $region17: #{tpu_custom_call.1} parent=1 // pred_fallthru
      _
    %v39 = vld [vmem:[#allocation2] sm:$0xff]
    %v40 = vld [vmem:[#allocation2 + $0x8] sm:$0xff]
    %v41 = vld [vmem:[#allocation2 + $0x10] sm:$0xff]
    %v42 = vld [vmem:[#allocation2 + $0x18] sm:$0xff]
    %v43 = vld [vmem:[#allocation2 + $0x20] sm:$0xff]
    %v44 = vld [vmem:[#allocation2 + $0x28] sm:$0xff]
    %v45 = vld [vmem:[#allocation2 + $0x30] sm:$0xff]
    %v46 = vld [vmem:[#allocation2 + $0x38] sm:$0xff]
    %v47 = vld [vmem:[#allocation2 + $0x40] sm:$0xff]
    %v48 = vld [vmem:[#allocation2 + $0x48] sm:$0xff]
    %v49 = vld [vmem:[#allocation2 + $0x50] sm:$0xff]
    %v50 = vld [vmem:[#allocation2 + $0x58] sm:$0xff]
    %v51 = vld [vmem:[#allocation2 + $0x60] sm:$0xff]
    %v52 = vld [vmem:[#allocation2 + $0x68] sm:$0xff]
    %v53 = vld [vmem:[#allocation2 + $0x70] sm:$0xff]
    %v54 = vld [vmem:[#allocation2 + $0x78] sm:$0xff]
    %v55 = vld [vmem:[#allocation4] sm:$0xff]
    %v56 = vld [vmem:[#allocation4 + $0x8] sm:$0xff]
    %v57 = vld [vmem:[#allocation4 + $0x10] sm:$0xff]
    %v58 = vld [vmem:[#allocation4 + $0x18] sm:$0xff]
    %v59 = vld [vmem:[#allocation4 + $0x20] sm:$0xff]
    %v60 = vld [vmem:[#allocation4 + $0x28] sm:$0xff]
    %v61 = vld [vmem:[#allocation4 + $0x30] sm:$0xff]
    %v62 = vld [vmem:[#allocation4 + $0x38] sm:$0xff]
    %v63 = vld [vmem:[#allocation4 + $0x40] sm:$0xff]
    %v64 = vld [vmem:[#allocation4 + $0x48] sm:$0xff]
    %v65 = vld [vmem:[#allocation4 + $0x50] sm:$0xff]
    %v66 = vld [vmem:[#allocation4 + $0x58] sm:$0xff]
    %v67 = vld [vmem:[#allocation4 + $0x60] sm:$0xff]
    %v68 = vld [vmem:[#allocation4 + $0x68] sm:$0xff]
    %v69 = vld [vmem:[#allocation4 + $0x70] sm:$0xff]
    %v70 = vld [vmem:[#allocation4 + $0x78] sm:$0xff]
    %v71 = vadd.f32 %v39, %v55
    %v72 = vadd.f32 %v40, %v56
    %v73 = vadd.f32 %v41, %v57
    %v74 = vadd.f32 %v42, %v58
    %v75 = vadd.f32 %v43, %v59
    %v76 = vadd.f32 %v44, %v60
    %v77 = vadd.f32 %v45, %v61
    %v78 = vadd.f32 %v46, %v62
    %v79 = vadd.f32 %v47, %v63
    %v80 = vadd.f32 %v48, %v64
    %v81 = vadd.f32 %v49, %v65
    %v82 = vadd.f32 %v50, %v66
    %v83 = vadd.f32 %v51, %v67
    %v84 = vadd.f32 %v52, %v68
    %v85 = vadd.f32 %v53, %v69
    %v86 = vadd.f32 %v54, %v70
    %v87 = vmax.f32 %v71, 0.0
    %v88 = vmax.f32 %v72, 0.0
    %v89 = vmax.f32 %v73, 0.0
    %v90 = vmax.f32 %v74, 0.0
    %v91 = vmax.f32 %v75, 0.0
    %v92 = vmax.f32 %v76, 0.0
    %v93 = vmax.f32 %v77, 0.0
    %v94 = vmax.f32 %v78, 0.0
    %v95 = vmax.f32 %v79, 0.0
    %v96 = vmax.f32 %v80, 0.0
    %v97 = vmax.f32 %v81, 0.0
    %v98 = vmax.f32 %v82, 0.0
    %v99 = vmax.f32 %v83, 0.0
    %v100 = vmax.f32 %v84, 0.0
    %v101 = vmax.f32 %v85, 0.0
    %v102 = vmax.f32 %v86, 0.0
    %119 = vrot.lane.b32.xlu0 %v87, 127
    %v120 = vpop.permute.xlu0 %119
    %121 = vrot.lane.b32.xlu0 %v88, 127
    %v122 = vpop.permute.xlu0 %121
    %123 = vrot.lane.b32.xlu0 %v89, 127
    %v124 = vpop.permute.xlu0 %123
    %125 = vrot.lane.b32.xlu0 %v90, 127
    %v126 = vpop.permute.xlu0 %125
    %127 = vrot.lane.b32.xlu0 %v91, 127
    %v128 = vpop.permute.xlu0 %127
    %129 = vrot.lane.b32.xlu0 %v92, 127
    %v130 = vpop.permute.xlu0 %129
    %131 = vrot.lane.b32.xlu0 %v93, 127
    %v132 = vpop.permute.xlu0 %131
    %133 = vrot.lane.b32.xlu0 %v94, 127
    %v134 = vpop.permute.xlu0 %133
    %135 = vrot.lane.b32.xlu0 %v95, 127
    %v136 = vpop.permute.xlu0 %135
    %137 = vrot.lane.b32.xlu0 %v96, 127
    %v138 = vpop.permute.xlu0 %137
    %139 = vrot.lane.b32.xlu0 %v97, 127
    %v140 = vpop.permute.xlu0 %139
    %141 = vrot.lane.b32.xlu0 %v98, 127
    %v142 = vpop.permute.xlu0 %141
    %143 = vrot.lane.b32.xlu0 %v99, 127
    %v144 = vpop.permute.xlu0 %143
    %145 = vrot.lane.b32.xlu0 %v100, 127
    %v146 = vpop.permute.xlu0 %145
    %147 = vrot.lane.b32.xlu0 %v101, 127
    %v148 = vpop.permute.xlu0 %147
    %149 = vrot.lane.b32.xlu0 %v102, 127
    %v150 = vpop.permute.xlu0 %149
    %v167 = vadd.f32 %v87, %v120
    %v168 = vadd.f32 %v88, %v122
    %v169 = vadd.f32 %v89, %v124
    %v170 = vadd.f32 %v90, %v126
    %v171 = vadd.f32 %v91, %v128
    %v172 = vadd.f32 %v92, %v130
    %v173 = vadd.f32 %v93, %v132
    %v174 = vadd.f32 %v94, %v134
    %v175 = vadd.f32 %v95, %v136
    %v176 = vadd.f32 %v96, %v138
    %v177 = vadd.f32 %v97, %v140
    %v178 = vadd.f32 %v98, %v142
    %v179 = vadd.f32 %v99, %v144
    %v180 = vadd.f32 %v100, %v146
    %v181 = vadd.f32 %v101, %v148
    %v182 = vadd.f32 %v102, %v150
    %183 = vrot.lane.b32.xlu0 %v87, 126
    %v184 = vpop.permute.xlu0 %183
    %185 = vrot.lane.b32.xlu0 %v88, 126
    %v186 = vpop.permute.xlu0 %185
    %187 = vrot.lane.b32.xlu0 %v89, 126
    %v188 = vpop.permute.xlu0 %187
    %189 = vrot.lane.b32.xlu0 %v90, 126
    %v190 = vpop.permute.xlu0 %189
    %191 = vrot.lane.b32.xlu0 %v91, 126
    %v192 = vpop.permute.xlu0 %191
    %193 = vrot.lane.b32.xlu0 %v92, 126
    %v194 = vpop.permute.xlu0 %193
    %195 = vrot.lane.b32.xlu0 %v93, 126
    %v196 = vpop.permute.xlu0 %195
    %197 = vrot.lane.b32.xlu0 %v94, 126
    %v198 = vpop.permute.xlu0 %197
    %199 = vrot.lane.b32.xlu0 %v95, 126
    %v200 = vpop.permute.xlu0 %199
    %201 = vrot.lane.b32.xlu0 %v96, 126
    %v202 = vpop.permute.xlu0 %201
    %203 = vrot.lane.b32.xlu0 %v97, 126
    %v204 = vpop.permute.xlu0 %203
    %205 = vrot.lane.b32.xlu0 %v98, 126
    %v206 = vpop.permute.xlu0 %205
    %207 = vrot.lane.b32.xlu0 %v99, 126
    %v208 = vpop.permute.xlu0 %207
    %209 = vrot.lane.b32.xlu0 %v100, 126
    %v210 = vpop.permute.xlu0 %209
    %211 = vrot.lane.b32.xlu0 %v101, 126
    %v212 = vpop.permute.xlu0 %211
    %213 = vrot.lane.b32.xlu0 %v102, 126
    %v214 = vpop.permute.xlu0 %213
    %v231 = vadd.f32 %v167, %v184
    %v232 = vadd.f32 %v168, %v186
    %v233 = vadd.f32 %v169, %v188
    %v234 = vadd.f32 %v170, %v190
    %v235 = vadd.f32 %v171, %v192
    %v236 = vadd.f32 %v172, %v194
    %v237 = vadd.f32 %v173, %v196
    %v238 = vadd.f32 %v174, %v198
    %v239 = vadd.f32 %v175, %v200
    %v240 = vadd.f32 %v176, %v202
    %v241 = vadd.f32 %v177, %v204
    %v242 = vadd.f32 %v178, %v206
    %v243 = vadd.f32 %v179, %v208
    %v244 = vadd.f32 %v180, %v210
    %v245 = vadd.f32 %v181, %v212
    %v246 = vadd.f32 %v182, %v214
    %247 = vrot.lane.b32.xlu0 %v87, 125
    %v248 = vpop.permute.xlu0 %247
    %249 = vrot.lane.b32.xlu0 %v88, 125
    %v250 = vpop.permute.xlu0 %249
    %251 = vrot.lane.b32.xlu0 %v89, 125
    %v252 = vpop.permute.xlu0 %251
    %253 = vrot.lane.b32.xlu0 %v90, 125
    %v254 = vpop.permute.xlu0 %253
    %255 = vrot.lane.b32.xlu0 %v91, 125
    %v256 = vpop.permute.xlu0 %255
    %257 = vrot.lane.b32.xlu0 %v92, 125
    %v258 = vpop.permute.xlu0 %257
    %259 = vrot.lane.b32.xlu0 %v93, 125
    %v260 = vpop.permute.xlu0 %259
    %261 = vrot.lane.b32.xlu0 %v94, 125
    %v262 = vpop.permute.xlu0 %261
    %263 = vrot.lane.b32.xlu0 %v95, 125
    %v264 = vpop.permute.xlu0 %263
    %265 = vrot.lane.b32.xlu0 %v96, 125
    %v266 = vpop.permute.xlu0 %265
    %267 = vrot.lane.b32.xlu0 %v97, 125
    %v268 = vpop.permute.xlu0 %267
    %269 = vrot.lane.b32.xlu0 %v98, 125
    %v270 = vpop.permute.xlu0 %269
    %271 = vrot.lane.b32.xlu0 %v99, 125
    %v272 = vpop.permute.xlu0 %271
    %273 = vrot.lane.b32.xlu0 %v100, 125
    %v274 = vpop.permute.xlu0 %273
    %275 = vrot.lane.b32.xlu0 %v101, 125
    %v276 = vpop.permute.xlu0 %275
    %277 = vrot.lane.b32.xlu0 %v102, 125
    %v278 = vpop.permute.xlu0 %277
    %v295 = vadd.f32 %v231, %v248
    %v296 = vadd.f32 %v232, %v250
    %v297 = vadd.f32 %v233, %v252
    %v298 = vadd.f32 %v234, %v254
    %v299 = vadd.f32 %v235, %v256
    %v300 = vadd.f32 %v236, %v258
    %v301 = vadd.f32 %v237, %v260
    %v302 = vadd.f32 %v238, %v262
    %v303 = vadd.f32 %v239, %v264
    %v304 = vadd.f32 %v240, %v266
    %v305 = vadd.f32 %v241, %v268
    %v306 = vadd.f32 %v242, %v270
    %v307 = vadd.f32 %v243, %v272
    %v308 = vadd.f32 %v244, %v274
    %v309 = vadd.f32 %v245, %v276
    %v310 = vadd.f32 %v246, %v278
    %311 = vrot.lane.b32.xlu0 %v87, 124
    %v312 = vpop.permute.xlu0 %311
    %313 = vrot.lane.b32.xlu0 %v88, 124
    %v314 = vpop.permute.xlu0 %313
    %315 = vrot.lane.b32.xlu0 %v89, 124
    %v316 = vpop.permute.xlu0 %315
    %317 = vrot.lane.b32.xlu0 %v90, 124
    %v318 = vpop.permute.xlu0 %317
    %319 = vrot.lane.b32.xlu0 %v91, 124
    %v320 = vpop.permute.xlu0 %319
    %321 = vrot.lane.b32.xlu0 %v92, 124
    %v322 = vpop.permute.xlu0 %321
    %323 = vrot.lane.b32.xlu0 %v93, 124
    %v324 = vpop.permute.xlu0 %323
    %325 = vrot.lane.b32.xlu0 %v94, 124
    %v326 = vpop.permute.xlu0 %325
    %327 = vrot.lane.b32.xlu0 %v95, 124
    %v328 = vpop.permute.xlu0 %327
    %329 = vrot.lane.b32.xlu0 %v96, 124
    %v330 = vpop.permute.xlu0 %329
    %331 = vrot.lane.b32.xlu0 %v97, 124
    %v332 = vpop.permute.xlu0 %331
    %333 = vrot.lane.b32.xlu0 %v98, 124
    %v334 = vpop.permute.xlu0 %333
    %335 = vrot.lane.b32.xlu0 %v99, 124
    %v336 = vpop.permute.xlu0 %335
    %337 = vrot.lane.b32.xlu0 %v100, 124
    %v338 = vpop.permute.xlu0 %337
    %339 = vrot.lane.b32.xlu0 %v101, 124
    %v340 = vpop.permute.xlu0 %339
    %341 = vrot.lane.b32.xlu0 %v102, 124
    %v342 = vpop.permute.xlu0 %341
    %v359 = vadd.f32 %v295, %v312
    %v360 = vadd.f32 %v296, %v314
    %v361 = vadd.f32 %v297, %v316
    %v362 = vadd.f32 %v298, %v318
    %v363 = vadd.f32 %v299, %v320
    %v364 = vadd.f32 %v300, %v322
    %v365 = vadd.f32 %v301, %v324
    %v366 = vadd.f32 %v302, %v326
    %v367 = vadd.f32 %v303, %v328
    %v368 = vadd.f32 %v304, %v330
    %v369 = vadd.f32 %v305, %v332
    %v370 = vadd.f32 %v306, %v334
    %v371 = vadd.f32 %v307, %v336
    %v372 = vadd.f32 %v308, %v338
    %v373 = vadd.f32 %v309, %v340
    %v374 = vadd.f32 %v310, %v342
    %375 = vrot.lane.b32.xlu0 %v87, 123
    %v376 = vpop.permute.xlu0 %375
    %377 = vrot.lane.b32.xlu0 %v88, 123
    %v378 = vpop.permute.xlu0 %377
    %379 = vrot.lane.b32.xlu0 %v89, 123
    %v380 = vpop.permute.xlu0 %379
    %381 = vrot.lane.b32.xlu0 %v90, 123
    %v382 = vpop.permute.xlu0 %381
    %383 = vrot.lane.b32.xlu0 %v91, 123
    %v384 = vpop.permute.xlu0 %383
    %385 = vrot.lane.b32.xlu0 %v92, 123
    %v386 = vpop.permute.xlu0 %385
    %387 = vrot.lane.b32.xlu0 %v93, 123
    %v388 = vpop.permute.xlu0 %387
    %389 = vrot.lane.b32.xlu0 %v94, 123
    %v390 = vpop.permute.xlu0 %389
    %391 = vrot.lane.b32.xlu0 %v95, 123
    %v392 = vpop.permute.xlu0 %391
    %393 = vrot.lane.b32.xlu0 %v96, 123
    %v394 = vpop.permute.xlu0 %393
    %395 = vrot.lane.b32.xlu0 %v97, 123
    %v396 = vpop.permute.xlu0 %395
    %397 = vrot.lane.b32.xlu0 %v98, 123
    %v398 = vpop.permute.xlu0 %397
    %399 = vrot.lane.b32.xlu0 %v99, 123
    %v400 = vpop.permute.xlu0 %399
    %401 = vrot.lane.b32.xlu0 %v100, 123
    %v402 = vpop.permute.xlu0 %401
    %403 = vrot.lane.b32.xlu0 %v101, 123
    %v404 = vpop.permute.xlu0 %403
    %405 = vrot.lane.b32.xlu0 %v102, 123
    %v406 = vpop.permute.xlu0 %405
    %v423 = vadd.f32 %v359, %v376
    %v424 = vadd.f32 %v360, %v378
    %v425 = vadd.f32 %v361, %v380
    %v426 = vadd.f32 %v362, %v382
    %v427 = vadd.f32 %v363, %v384
    %v428 = vadd.f32 %v364, %v386
    %v429 = vadd.f32 %v365, %v388
    %v430 = vadd.f32 %v366, %v390
    %v431 = vadd.f32 %v367, %v392
    %v432 = vadd.f32 %v368, %v394
    %v433 = vadd.f32 %v369, %v396
    %v434 = vadd.f32 %v370, %v398
    %v435 = vadd.f32 %v371, %v400
    %v436 = vadd.f32 %v372, %v402
    %v437 = vadd.f32 %v373, %v404
    %v438 = vadd.f32 %v374, %v406
    %439 = vrot.lane.b32.xlu0 %v87, 122
    %v440 = vpop.permute.xlu0 %439
    %441 = vrot.lane.b32.xlu0 %v88, 122
    %v442 = vpop.permute.xlu0 %441
    %443 = vrot.lane.b32.xlu0 %v89, 122
    %v444 = vpop.permute.xlu0 %443
    %445 = vrot.lane.b32.xlu0 %v90, 122
    %v446 = vpop.permute.xlu0 %445
    %447 = vrot.lane.b32.xlu0 %v91, 122
    %v448 = vpop.permute.xlu0 %447
    %449 = vrot.lane.b32.xlu0 %v92, 122
    %v450 = vpop.permute.xlu0 %449
    %451 = vrot.lane.b32.xlu0 %v93, 122
    %v452 = vpop.permute.xlu0 %451
    %453 = vrot.lane.b32.xlu0 %v94, 122
    %v454 = vpop.permute.xlu0 %453
    %455 = vrot.lane.b32.xlu0 %v95, 122
    %v456 = vpop.permute.xlu0 %455
    %457 = vrot.lane.b32.xlu0 %v96, 122
    %v458 = vpop.permute.xlu0 %457
    %459 = vrot.lane.b32.xlu0 %v97, 122
    %v460 = vpop.permute.xlu0 %459
    %461 = vrot.lane.b32.xlu0 %v98, 122
    %v462 = vpop.permute.xlu0 %461
    %463 = vrot.lane.b32.xlu0 %v99, 122
    %v464 = vpop.permute.xlu0 %463
    %465 = vrot.lane.b32.xlu0 %v100, 122
    %v466 = vpop.permute.xlu0 %465
    %467 = vrot.lane.b32.xlu0 %v101, 122
    %v468 = vpop.permute.xlu0 %467
    %469 = vrot.lane.b32.xlu0 %v102, 122
    %v470 = vpop.permute.xlu0 %469
    %v487 = vadd.f32 %v423, %v440
    %v488 = vadd.f32 %v424, %v442
    %v489 = vadd.f32 %v425, %v444
    %v490 = vadd.f32 %v426, %v446
    %v491 = vadd.f32 %v427, %v448
    %v492 = vadd.f32 %v428, %v450
    %v493 = vadd.f32 %v429, %v452
    %v494 = vadd.f32 %v430, %v454
    %v495 = vadd.f32 %v431, %v456
    %v496 = vadd.f32 %v432, %v458
    %v497 = vadd.f32 %v433, %v460
    %v498 = vadd.f32 %v434, %v462
    %v499 = vadd.f32 %v435, %v464
    %v500 = vadd.f32 %v436, %v466
    %v501 = vadd.f32 %v437, %v468
    %v502 = vadd.f32 %v438, %v470
    %vm519 = vcmask 1046528
    %v520 = vrot.slane %v487, 1
    %v521 = vrot.slane %v488, 1
    %v522 = vsel %vm519, %v520, %v521
    %v523 = vrot.slane %v489, 1
    %v524 = vrot.slane %v490, 1
    %v525 = vsel %vm519, %v523, %v524
    %v526 = vrot.slane %v491, 1
    %v527 = vrot.slane %v492, 1
    %v528 = vsel %vm519, %v526, %v527
    %v529 = vrot.slane %v493, 1
    %v530 = vrot.slane %v494, 1
    %v531 = vsel %vm519, %v529, %v530
    %v532 = vrot.slane %v495, 1
    %v533 = vrot.slane %v496, 1
    %v534 = vsel %vm519, %v532, %v533
    %v535 = vrot.slane %v497, 1
    %v536 = vrot.slane %v498, 1
    %v537 = vsel %vm519, %v535, %v536
    %v538 = vrot.slane %v499, 1
    %v539 = vrot.slane %v500, 1
    %v540 = vsel %vm519, %v538, %v539
    %v541 = vrot.slane %v501, 1
    %v542 = vrot.slane %v502, 1
    %v543 = vsel %vm519, %v541, %v542
    %v560 = vadd.f32 %v487, %v522
    %v561 = vadd.f32 %v488, %v521
    %v562 = vadd.f32 %v489, %v525
    %v563 = vadd.f32 %v490, %v524
    %v564 = vadd.f32 %v491, %v528
    %v565 = vadd.f32 %v492, %v527
    %v566 = vadd.f32 %v493, %v531
    %v567 = vadd.f32 %v494, %v530
    %v568 = vadd.f32 %v495, %v534
    %v569 = vadd.f32 %v496, %v533
    %v570 = vadd.f32 %v497, %v537
    %v571 = vadd.f32 %v498, %v536
    %v572 = vadd.f32 %v499, %v540
    %v573 = vadd.f32 %v500, %v539
    %v574 = vadd.f32 %v501, %v543
    %v575 = vadd.f32 %v502, %v542
    %vm576 = vcmask 1045504
    %v577 = vrot.slane %v487, 2
    %v578 = vrot.slane %v488, 2
    %v579 = vsel %vm576, %v577, %v578
    %v580 = vrot.slane %v489, 2
    %v581 = vrot.slane %v490, 2
    %v582 = vsel %vm576, %v580, %v581
    %v583 = vrot.slane %v491, 2
    %v584 = vrot.slane %v492, 2
    %v585 = vsel %vm576, %v583, %v584
    %v586 = vrot.slane %v493, 2
    %v587 = vrot.slane %v494, 2
    %v588 = vsel %vm576, %v586, %v587
    %v589 = vrot.slane %v495, 2
    %v590 = vrot.slane %v496, 2
    %v591 = vsel %vm576, %v589, %v590
    %v592 = vrot.slane %v497, 2
    %v593 = vrot.slane %v498, 2
    %v594 = vsel %vm576, %v592, %v593
    %v595 = vrot.slane %v499, 2
    %v596 = vrot.slane %v500, 2
    %v597 = vsel %vm576, %v595, %v596
    %v598 = vrot.slane %v501, 2
    %v599 = vrot.slane %v502, 2
    %v600 = vsel %vm576, %v598, %v599
    %v617 = vadd.f32 %v560, %v579
    %v618 = vadd.f32 %v561, %v578
    %v619 = vadd.f32 %v562, %v582
    %v620 = vadd.f32 %v563, %v581
    %v621 = vadd.f32 %v564, %v585
    %v622 = vadd.f32 %v565, %v584
    %v623 = vadd.f32 %v566, %v588
    %v624 = vadd.f32 %v567, %v587
    %v625 = vadd.f32 %v568, %v591
    %v626 = vadd.f32 %v569, %v590
    %v627 = vadd.f32 %v570, %v594
    %v628 = vadd.f32 %v571, %v593
    %v629 = vadd.f32 %v572, %v597
    %v630 = vadd.f32 %v573, %v596
    %v631 = vadd.f32 %v574, %v600
    %v632 = vadd.f32 %v575, %v599
    %vm633 = vcmask 1044480
    %v634 = vrot.slane %v487, 3
    %v635 = vrot.slane %v488, 3
    %v636 = vsel %vm633, %v634, %v635
    %v637 = vrot.slane %v489, 3
    %v638 = vrot.slane %v490, 3
    %v639 = vsel %vm633, %v637, %v638
    %v640 = vrot.slane %v491, 3
    %v641 = vrot.slane %v492, 3
    %v642 = vsel %vm633, %v640, %v641
    %v643 = vrot.slane %v493, 3
    %v644 = vrot.slane %v494, 3
    %v645 = vsel %vm633, %v643, %v644
    %v646 = vrot.slane %v495, 3
    %v647 = vrot.slane %v496, 3
    %v648 = vsel %vm633, %v646, %v647
    %v649 = vrot.slane %v497, 3
    %v650 = vrot.slane %v498, 3
    %v651 = vsel %vm633, %v649, %v650
    %v652 = vrot.slane %v499, 3
    %v653 = vrot.slane %v500, 3
    %v654 = vsel %vm633, %v652, %v653
    %v655 = vrot.slane %v501, 3
    %v656 = vrot.slane %v502, 3
    %v657 = vsel %vm633, %v655, %v656
    %v674 = vadd.f32 %v617, %v636
    %v675 = vadd.f32 %v618, %v635
    %v676 = vadd.f32 %v619, %v639
    %v677 = vadd.f32 %v620, %v638
    %v678 = vadd.f32 %v621, %v642
    %v679 = vadd.f32 %v622, %v641
    %v680 = vadd.f32 %v623, %v645
    %v681 = vadd.f32 %v624, %v644
    %v682 = vadd.f32 %v625, %v648
    %v683 = vadd.f32 %v626, %v647
    %v684 = vadd.f32 %v627, %v651
    %v685 = vadd.f32 %v628, %v650
    %v686 = vadd.f32 %v629, %v654
    %v687 = vadd.f32 %v630, %v653
    %v688 = vadd.f32 %v631, %v657
    %v689 = vadd.f32 %v632, %v656
    %vm690 = vcmask 1043456
    %v691 = vrot.slane %v487, 4
    %v692 = vrot.slane %v488, 4
    %v693 = vsel %vm690, %v691, %v692
    %v694 = vrot.slane %v489, 4
    %v695 = vrot.slane %v490, 4
    %v696 = vsel %vm690, %v694, %v695
    %v697 = vrot.slane %v491, 4
    %v698 = vrot.slane %v492, 4
    %v699 = vsel %vm690, %v697, %v698
    %v700 = vrot.slane %v493, 4
    %v701 = vrot.slane %v494, 4
    %v702 = vsel %vm690, %v700, %v701
    %v703 = vrot.slane %v495, 4
    %v704 = vrot.slane %v496, 4
    %v705 = vsel %vm690, %v703, %v704
    %v706 = vrot.slane %v497, 4
    %v707 = vrot.slane %v498, 4
    %v708 = vsel %vm690, %v706, %v707
    %v709 = vrot.slane %v499, 4
    %v710 = vrot.slane %v500, 4
    %v711 = vsel %vm690, %v709, %v710
    %v712 = vrot.slane %v501, 4
    %v713 = vrot.slane %v502, 4
    %v714 = vsel %vm690, %v712, %v713
    %v731 = vadd.f32 %v674, %v693
    %v732 = vadd.f32 %v675, %v692
    %v733 = vadd.f32 %v676, %v696
    %v734 = vadd.f32 %v677, %v695
    %v735 = vadd.f32 %v678, %v699
    %v736 = vadd.f32 %v679, %v698
    %v737 = vadd.f32 %v680, %v702
    %v738 = vadd.f32 %v681, %v701
    %v739 = vadd.f32 %v682, %v705
    %v740 = vadd.f32 %v683, %v704
    %v741 = vadd.f32 %v684, %v708
    %v742 = vadd.f32 %v685, %v707
    %v743 = vadd.f32 %v686, %v711
    %v744 = vadd.f32 %v687, %v710
    %v745 = vadd.f32 %v688, %v714
    %v746 = vadd.f32 %v689, %v713
    %vm747 = vcmask 1042432
    %v748 = vrot.slane %v487, 5
    %v749 = vrot.slane %v488, 5
    %v750 = vsel %vm747, %v748, %v749
    %v751 = vrot.slane %v489, 5
    %v752 = vrot.slane %v490, 5
    %v753 = vsel %vm747, %v751, %v752
    %v754 = vrot.slane %v491, 5
    %v755 = vrot.slane %v492, 5
    %v756 = vsel %vm747, %v754, %v755
    %v757 = vrot.slane %v493, 5
    %v758 = vrot.slane %v494, 5
    %v759 = vsel %vm747, %v757, %v758
    %v760 = vrot.slane %v495, 5
    %v761 = vrot.slane %v496, 5
    %v762 = vsel %vm747, %v760, %v761
    %v763 = vrot.slane %v497, 5
    %v764 = vrot.slane %v498, 5
    %v765 = vsel %vm747, %v763, %v764
    %v766 = vrot.slane %v499, 5
    %v767 = vrot.slane %v500, 5
    %v768 = vsel %vm747, %v766, %v767
    %v769 = vrot.slane %v501, 5
    %v770 = vrot.slane %v502, 5
    %v771 = vsel %vm747, %v769, %v770
    %v788 = vadd.f32 %v731, %v750
    %v789 = vadd.f32 %v732, %v749
    %v790 = vadd.f32 %v733, %v753
    %v791 = vadd.f32 %v734, %v752
    %v792 = vadd.f32 %v735, %v756
    %v793 = vadd.f32 %v736, %v755
    %v794 = vadd.f32 %v737, %v759
    %v795 = vadd.f32 %v738, %v758
    %v796 = vadd.f32 %v739, %v762
    %v797 = vadd.f32 %v740, %v761
    %v798 = vadd.f32 %v741, %v765
    %v799 = vadd.f32 %v742, %v764
    %v800 = vadd.f32 %v743, %v768
    %v801 = vadd.f32 %v744, %v767
    %v802 = vadd.f32 %v745, %v771
    %v803 = vadd.f32 %v746, %v770
    %vm804 = vcmask 1041408
    %v805 = vrot.slane %v487, 6
    %v806 = vrot.slane %v488, 6
    %v807 = vsel %vm804, %v805, %v806
    %v808 = vrot.slane %v489, 6
    %v809 = vrot.slane %v490, 6
    %v810 = vsel %vm804, %v808, %v809
    %v811 = vrot.slane %v491, 6
    %v812 = vrot.slane %v492, 6
    %v813 = vsel %vm804, %v811, %v812
    %v814 = vrot.slane %v493, 6
    %v815 = vrot.slane %v494, 6
    %v816 = vsel %vm804, %v814, %v815
    %v817 = vrot.slane %v495, 6
    %v818 = vrot.slane %v496, 6
    %v819 = vsel %vm804, %v817, %v818
    %v820 = vrot.slane %v497, 6
    %v821 = vrot.slane %v498, 6
    %v822 = vsel %vm804, %v820, %v821
    %v823 = vrot.slane %v499, 6
    %v824 = vrot.slane %v500, 6
    %v825 = vsel %vm804, %v823, %v824
    %v826 = vrot.slane %v501, 6
    %v827 = vrot.slane %v502, 6
    %v828 = vsel %vm804, %v826, %v827
    %v845 = vadd.f32 %v788, %v807
    %v846 = vadd.f32 %v789, %v806
    %v847 = vadd.f32 %v790, %v810
    %v848 = vadd.f32 %v791, %v809
    %v849 = vadd.f32 %v792, %v813
    %v850 = vadd.f32 %v793, %v812
    %v851 = vadd.f32 %v794, %v816
    %v852 = vadd.f32 %v795, %v815
    %v853 = vadd.f32 %v796, %v819
    %v854 = vadd.f32 %v797, %v818
    %v855 = vadd.f32 %v798, %v822
    %v856 = vadd.f32 %v799, %v821
    %v857 = vadd.f32 %v800, %v825
    %v858 = vadd.f32 %v801, %v824
    %v859 = vadd.f32 %v802, %v828
    %v860 = vadd.f32 %v803, %v827
    %v861 = vmul.f32 %v845, 0.020408163
    %v862 = vmul.f32 %v846, 0.020408163
    %v863 = vmul.f32 %v847, 0.020408163
    %v864 = vmul.f32 %v848, 0.020408163
    %v865 = vmul.f32 %v849, 0.020408163
    %v866 = vmul.f32 %v850, 0.020408163
    %v867 = vmul.f32 %v851, 0.020408163
    %v868 = vmul.f32 %v852, 0.020408163
    %v869 = vmul.f32 %v853, 0.020408163
    %v870 = vmul.f32 %v854, 0.020408163
    %v871 = vmul.f32 %v855, 0.020408163
    %v872 = vmul.f32 %v856, 0.020408163
    %v873 = vmul.f32 %v857, 0.020408163
    %v874 = vmul.f32 %v858, 0.020408163
    %v875 = vmul.f32 %v859, 0.020408163
    %v876 = vmul.f32 %v860, 0.020408163
    %vm877 = vcmask 80896
    %878 = vst.msk [vmem:[%s2] sm:$0xff] %vm877, %v861
    %vm879 = vcmask 74752
    %880 = vst.msk [vmem:[%s2 + $0x8] sm:$0x3] %vm879, %v862
    %881 = vst.msk [vmem:[%s2 + $0x10] sm:$0xff] %vm877, %v863
    %882 = vst.msk [vmem:[%s2 + $0x18] sm:$0x3] %vm879, %v864
    %883 = vst.msk [vmem:[%s2 + $0x20] sm:$0xff] %vm877, %v865
    %884 = vst.msk [vmem:[%s2 + $0x28] sm:$0x3] %vm879, %v866
    %885 = vst.msk [vmem:[%s2 + $0x30] sm:$0xff] %vm877, %v867
    %886 = vst.msk [vmem:[%s2 + $0x38] sm:$0x3] %vm879, %v868
    %887 = vst.msk [vmem:[%s2 + $0x40] sm:$0xff] %vm877, %v869
    %888 = vst.msk [vmem:[%s2 + $0x48] sm:$0x3] %vm879, %v870
    %889 = vst.msk [vmem:[%s2 + $0x50] sm:$0xff] %vm877, %v871
    %890 = vst.msk [vmem:[%s2 + $0x58] sm:$0x3] %vm879, %v872
    %891 = vst.msk [vmem:[%s2 + $0x60] sm:$0xff] %vm877, %v873
    %892 = vst.msk [vmem:[%s2 + $0x68] sm:$0x3] %vm879, %v874
    %893 = vst.msk [vmem:[%s2 + $0x70] sm:$0xff] %vm877, %v875
    %894 = vst.msk [vmem:[%s2 + $0x78] sm:$0x3] %vm879, %v876
    // Predicated region
    $region18: #{tpu_custom_call.1} parent=1 // pred_check
      _
    $region19: #{tpu_custom_call.1} parent=1 // pred_check_branch
      %896 = sbr.rel (0) target = $region21
    $region20: #{tpu_custom_call.1} parent=1 // pred_region
      _
    $region21: #{tpu_custom_call.1} parent=1 // pred_fallthru
      _
    // Predicated region
    $region22: #{tpu_custom_call.1} parent=1 // pred_check
      _
    $region23: #{tpu_custom_call.1} parent=1 // pred_check_branch
      %898 = sbr.rel (0) target = $region25
    $region24: #{tpu_custom_call.1} parent=1 // pred_region
      _
    $region25: #{tpu_custom_call.1} parent=1 // pred_fallthru
      _
    %899 = vsyncpa [#allocation3], 1
    %900 = vsyncpa [#allocation5], 1

</llo_original>
